<compile_context>
chip_gen: v5e
topology: v5e:2x2
jax: 0.10.0
libtpu: 0.0.40
codegen_flags: <defaults>
</compile_context>

<pallas_src>
import math

import jax
import jax.numpy as jnp
from jax import lax
from jax.experimental import pallas as pl
from jax.experimental.pallas import tpu as pltpu

EPS = 1e-5
KSIZE = 5
PAD = 2


def _fused_kernel(x_ref, w_ref, o_ref):
    # x_ref: (B, L0, D) raw input (whole batch resident in VMEM)
    # w_ref: (L, KSIZE*L0) packed conv weight with the diff folded in:
    #        W[o, k*L0 + m] = sum_i w_torch[o, i, k] * Dmat[i, m]
    # o_ref: (B, D, D) softmax(scores, dim=-3)
    B, L0, D = x_ref.shape
    L = w_ref.shape[0]
    W = w_ref[...]                                    # (L, KSIZE*L0)
    inv_sqrt_l = 1.0 / math.sqrt(L)

    # im2col: circular lane padding + KSIZE shifted views, all B batches stacked along
    # lanes, so diff + circular 5-tap conv for the WHOLE batch is ONE MXU push.
    stacks = []
    for b in range(B):                                # B tiny & static: fully unrolled
        x = x_ref[b]                                  # (L0, D) f32
        xpad = jnp.concatenate([x[:, D - PAD:], x, x[:, :PAD]], axis=1)            # (L0, D+4)
        stacks.append(
            jnp.concatenate([xpad[:, k:k + D] for k in range(KSIZE)], axis=0))     # (KSIZE*L0, D)
    xstack = jnp.concatenate(stacks, axis=1)          # (KSIZE*L0, B*D)
    y_all = jnp.dot(W, xstack, preferred_element_type=jnp.float32)                 # (L, B*D)

    # Per-batch normalization over D (== dim 1 of the permuted (B, D, L) tensor),
    # unbiased=False, then scores[i, j] = sum_l z[l, i] * z[l, j] / sqrt(L).
    scores = []
    for b in range(B):
        y = y_all[:, b * D:(b + 1) * D]               # (L, D)
        mean = jnp.mean(y, axis=1, keepdims=True)                  # (L, 1)
        var = jnp.mean((y - mean) ** 2, axis=1, keepdims=True)     # (L, 1)
        z = (y - mean) * lax.rsqrt(var + EPS)                      # (L, D)  (rsqrt -> EUP)
        s = lax.dot_general(z, z, (((0,), (0,)), ((), ())),
                            preferred_element_type=jnp.float32)    # (D, D)
        scores.append(s * inv_sqrt_l)

    # F.softmax(scale * scores, dim=-3): for a (B, D, D) tensor, -3 is the BATCH axis.
    # NOTE: for large B replace this unrolled two-pass form with an online (running-max)
    # lax.fori_loop + VMEM scratch to keep vreg pressure O(1); at B=2 unrolled is optimal.
    m = scores[0]
    for s in scores[1:]:
        m = jnp.maximum(m, s)
    exps = [jnp.exp(s - m) for s in scores]
    denom = exps[0]
    for e in exps[1:]:
        denom = denom + e
    inv_denom = 1.0 / denom                           # exact reciprocal (free accuracy)

    # Single coalesced store instead of B masked partial stores.
    o_ref[...] = jnp.stack([e * inv_denom for e in exps], axis=0)
    # TODO(synk): training-mode Dropout (random masking) not implemented; eval => identity.


def pack_weight(w):
    """Parameter-load-time prep (hoisted out of the per-call hot path).

    w: (L, L, KSIZE) Conv1d weight in PyTorch layout (out_channels, in_channels, kernel),
    L = input_length - 1.  Returns the (L, KSIZE*L0) packed weight with torch.diff folded
    in: W[o, k*L0 + m] = sum_i w[o, i, k] * Dmat[i, m], Dmat the (L, L0) difference matrix.
    """
    L = w.shape[0]
    L0 = L + 1
    d_mat = (-jnp.eye(L, L0, dtype=jnp.float32)
             + jnp.eye(L, L0, k=1, dtype=jnp.float32))             # (L, L0): xd = Dmat @ x
    w2 = jnp.einsum("oik,im->okm", w.astype(jnp.float32), d_mat)   # (L, KSIZE, L0)
    return w2.reshape(L, KSIZE * L0)


def dim_generate_graph(x, w_pack):
    """x: (B, L0, D) float32.  w_pack: (L, KSIZE*L0) packed weight from pack_weight().
    Returns (B, D, D) float32."""
    B, L0, D = x.shape
    assert D >= PAD, "circular padding assumes D >= PAD"
    assert w_pack.shape == (L0 - 1, KSIZE * L0), w_pack.shape

    # Grid-less call: whole problem in one kernel invocation, all operands fully VMEM
    # resident, no pipeline prologue/epilogue bookkeeping.
    return pl.pallas_call(
        _fused_kernel,
        out_shape=jax.ShapeDtypeStruct((B, D, D), jnp.float32),
        in_specs=[
            pl.BlockSpec(memory_space=pltpu.MemorySpace.VMEM),
            pl.BlockSpec(memory_space=pltpu.MemorySpace.VMEM),
        ],
        out_specs=pl.BlockSpec(memory_space=pltpu.MemorySpace.VMEM),
    )(x, w_pack)


def _reference(x, w):
    """Pure-JAX reference mirroring the PyTorch forward (eval mode), built from the RAW
    (un-packed) Conv1d weight so it is an independent check of the folded-weight kernel."""
    xd = jnp.diff(x, axis=1)                                              # (B, L, D)
    B, L, D = xd.shape
    xpad = jnp.concatenate([xd[..., -PAD:], xd, xd[..., :PAD]], axis=-1)  # (B, L, D+4)
    y = jnp.zeros((B, L, D), jnp.float32)
    for k in range(KSIZE):
        y = y + jnp.einsum("oi,bid->bod", w[:, :, k], xpad[:, :, k:k + D])
    p = jnp.transpose(y, (0, 2, 1))                                       # (B, D, L)
    mean = jnp.mean(p, axis=1, keepdims=True)
    var = jnp.mean((p - mean) ** 2, axis=1, keepdims=True)
    pn = (p - mean) / jnp.sqrt(var + EPS)
    scores = jnp.einsum("ble,bse->bls", pn, pn) / math.sqrt(L)            # (B, D, D)
    return jax.nn.softmax(scores, axis=0)                                 # dim=-3 == batch


if __name__ == "__main__":
    B, L0, D = 2, 9, 16
    L = L0 - 1

    key = jax.random.PRNGKey(0)
    kx, kw = jax.random.split(key)
    x = jax.random.normal(kx, (B, L0, D), dtype=jnp.float32)
    # Deterministic Conv1d-style init: U(-1/sqrt(fan_in), 1/sqrt(fan_in)), fan_in = L*KSIZE
    bound = 1.0 / math.sqrt(L * KSIZE)
    w = jax.random.uniform(kw, (L, L, KSIZE), minval=-bound, maxval=bound,
                           dtype=jnp.float32)

    # One-time parameter prep (diff fold + im2col packing) outside the hot path.
    w_pack = jax.block_until_ready(pack_weight(w))

    out = dim_generate_graph(x, w_pack)
    out = jax.block_until_ready(out)

    ref = _reference(x, w)
    assert out.shape == (B, D, D), out.shape
    # Exact-reciprocal softmax denominator -> tolerance tightened vs. previous version.
    # Remaining headroom only covers default MXU/XLA f32 matmul precision differences
    # between the fused kernel and the un-fused pure-JAX reference.
    assert jnp.allclose(out, ref, atol=1e-3, rtol=1e-3), float(
        jnp.max(jnp.abs(out - ref))
    )
    print("KERNEL_OK")
</pallas_src>

<mosaic_0001>
module attributes {stable_mosaic.version = 11 : i64} {
  func.func @_fused_kernel(%arg0: memref<2x9x16xf32, #tpu.memory_space<vmem>>, %arg1: memref<8x45xf32, #tpu.memory_space<vmem>>, %arg2: memref<2x16x16xf32, #tpu.memory_space<vmem>>) attributes {dimension_semantics = [], scalar_prefetch = 0 : i64, scratch_operands = 0 : i64, tpu.core_type = #tpu.core_type<tc>} {
    %c0 = arith.constant 0 : index
    %c0_0 = arith.constant 0 : index
    %0 = vector.load %arg1[%c0, %c0_0] : memref<8x45xf32, #tpu.memory_space<vmem>>, vector<8x45xf32>
    %c0_1 = arith.constant 0 : index
    %c0_2 = arith.constant 0 : index
    %c0_3 = arith.constant 0 : index
    %1 = vector.load %arg0[%c0_1, %c0_2, %c0_3] : memref<2x9x16xf32, #tpu.memory_space<vmem>>, vector<1x9x16xf32>
    %2 = vector.shape_cast %1 : vector<1x9x16xf32> to vector<9x16xf32>
    %3 = vector.extract_strided_slice %2 {offsets = [0, 14], sizes = [9, 2], strides = [1, 1]} : vector<9x16xf32> to vector<9x2xf32>
    %4 = vector.extract_strided_slice %2 {offsets = [0, 0], sizes = [9, 2], strides = [1, 1]} : vector<9x16xf32> to vector<9x2xf32>
    %5 = tpu.concatenate %3, %2, %4 in 1 : vector<9x2xf32>, vector<9x16xf32>, vector<9x2xf32> -> vector<9x20xf32>
    %6 = vector.extract_strided_slice %5 {offsets = [0, 0], sizes = [9, 16], strides = [1, 1]} : vector<9x20xf32> to vector<9x16xf32>
    %7 = vector.extract_strided_slice %5 {offsets = [0, 1], sizes = [9, 16], strides = [1, 1]} : vector<9x20xf32> to vector<9x16xf32>
    %8 = vector.extract_strided_slice %5 {offsets = [0, 2], sizes = [9, 16], strides = [1, 1]} : vector<9x20xf32> to vector<9x16xf32>
    %9 = vector.extract_strided_slice %5 {offsets = [0, 3], sizes = [9, 16], strides = [1, 1]} : vector<9x20xf32> to vector<9x16xf32>
    %10 = vector.extract_strided_slice %5 {offsets = [0, 4], sizes = [9, 16], strides = [1, 1]} : vector<9x20xf32> to vector<9x16xf32>
    %11 = tpu.concatenate %6, %7, %8, %9, %10 in 0 : vector<9x16xf32>, vector<9x16xf32>, vector<9x16xf32>, vector<9x16xf32>, vector<9x16xf32> -> vector<45x16xf32>
    %c1 = arith.constant 1 : index
    %c0_4 = arith.constant 0 : index
    %c0_5 = arith.constant 0 : index
    %12 = vector.load %arg0[%c1, %c0_4, %c0_5] : memref<2x9x16xf32, #tpu.memory_space<vmem>>, vector<1x9x16xf32>
    %13 = vector.shape_cast %12 : vector<1x9x16xf32> to vector<9x16xf32>
    %14 = vector.extract_strided_slice %13 {offsets = [0, 14], sizes = [9, 2], strides = [1, 1]} : vector<9x16xf32> to vector<9x2xf32>
    %15 = vector.extract_strided_slice %13 {offsets = [0, 0], sizes = [9, 2], strides = [1, 1]} : vector<9x16xf32> to vector<9x2xf32>
    %16 = tpu.concatenate %14, %13, %15 in 1 : vector<9x2xf32>, vector<9x16xf32>, vector<9x2xf32> -> vector<9x20xf32>
    %17 = vector.extract_strided_slice %16 {offsets = [0, 0], sizes = [9, 16], strides = [1, 1]} : vector<9x20xf32> to vector<9x16xf32>
    %18 = vector.extract_strided_slice %16 {offsets = [0, 1], sizes = [9, 16], strides = [1, 1]} : vector<9x20xf32> to vector<9x16xf32>
    %19 = vector.extract_strided_slice %16 {offsets = [0, 2], sizes = [9, 16], strides = [1, 1]} : vector<9x20xf32> to vector<9x16xf32>
    %20 = vector.extract_strided_slice %16 {offsets = [0, 3], sizes = [9, 16], strides = [1, 1]} : vector<9x20xf32> to vector<9x16xf32>
    %21 = vector.extract_strided_slice %16 {offsets = [0, 4], sizes = [9, 16], strides = [1, 1]} : vector<9x20xf32> to vector<9x16xf32>
    %22 = tpu.concatenate %17, %18, %19, %20, %21 in 0 : vector<9x16xf32>, vector<9x16xf32>, vector<9x16xf32>, vector<9x16xf32>, vector<9x16xf32> -> vector<45x16xf32>
    %23 = tpu.concatenate %11, %22 in 1 : vector<45x16xf32>, vector<45x16xf32> -> vector<45x32xf32>
    %cst = arith.constant dense<0.000000e+00> : vector<8x32xf32>
    %24 = tpu.matmul %0, %23, %cst {dimension_numbers = #tpu.dot_dimension_numbers<[1], [0], [0], [1], [0, 0, 1, 1], [], []>} : vector<8x45xf32>, vector<45x32xf32>, vector<8x32xf32> -> vector<8x32xf32>
    %25 = vector.extract_strided_slice %24 {offsets = [0, 0], sizes = [8, 16], strides = [1, 1]} : vector<8x32xf32> to vector<8x16xf32>
    %cst_6 = arith.constant dense<0.000000e+00> : vector<8xf32>
    %26 = vector.multi_reduction <add>, %25, %cst_6 [1] : vector<8x16xf32> to vector<8xf32>
    %27 = vector.shape_cast %26 : vector<8xf32> to vector<8x1xf32>
    %cst_7 = arith.constant 1.600000e+01 : f32
    %28 = vector.broadcast %cst_7 : f32 to vector<8x1xf32>
    %29 = arith.divf %27, %28 : vector<8x1xf32>
    %30 = vector.broadcast %29 : vector<8x1xf32> to vector<8x16xf32>
    %31 = arith.subf %25, %30 : vector<8x16xf32>
    %32 = arith.mulf %31, %31 : vector<8x16xf32>
    %cst_8 = arith.constant dense<0.000000e+00> : vector<8xf32>
    %33 = vector.multi_reduction <add>, %32, %cst_8 [1] : vector<8x16xf32> to vector<8xf32>
    %34 = vector.shape_cast %33 : vector<8xf32> to vector<8x1xf32>
    %cst_9 = arith.constant 1.600000e+01 : f32
    %35 = vector.broadcast %cst_9 : f32 to vector<8x1xf32>
    %36 = arith.divf %34, %35 : vector<8x1xf32>
    %37 = vector.broadcast %29 : vector<8x1xf32> to vector<8x16xf32>
    %38 = arith.subf %25, %37 : vector<8x16xf32>
    %cst_10 = arith.constant 9.99999974E-6 : f32
    %39 = vector.broadcast %cst_10 : f32 to vector<8x1xf32>
    %40 = arith.addf %36, %39 : vector<8x1xf32>
    %41 = math.rsqrt %40 : vector<8x1xf32>
    %42 = vector.broadcast %41 : vector<8x1xf32> to vector<8x16xf32>
    %43 = arith.mulf %38, %42 : vector<8x16xf32>
    %cst_11 = arith.constant dense<0.000000e+00> : vector<16x16xf32>
    %44 = tpu.matmul %43, %43, %cst_11 {dimension_numbers = #tpu.dot_dimension_numbers<[0], [0], [1], [1], [0, 1, 1, 1], [], []>} : vector<8x16xf32>, vector<8x16xf32>, vector<16x16xf32> -> vector<16x16xf32>
    %cst_12 = arith.constant 0.353553385 : f32
    %45 = vector.broadcast %cst_12 : f32 to vector<16x16xf32>
    %46 = arith.mulf %44, %45 : vector<16x16xf32>
    %47 = vector.extract_strided_slice %24 {offsets = [0, 16], sizes = [8, 16], strides = [1, 1]} : vector<8x32xf32> to vector<8x16xf32>
    %cst_13 = arith.constant dense<0.000000e+00> : vector<8xf32>
    %48 = vector.multi_reduction <add>, %47, %cst_13 [1] : vector<8x16xf32> to vector<8xf32>
    %49 = vector.shape_cast %48 : vector<8xf32> to vector<8x1xf32>
    %cst_14 = arith.constant 1.600000e+01 : f32
    %50 = vector.broadcast %cst_14 : f32 to vector<8x1xf32>
    %51 = arith.divf %49, %50 : vector<8x1xf32>
    %52 = vector.broadcast %51 : vector<8x1xf32> to vector<8x16xf32>
    %53 = arith.subf %47, %52 : vector<8x16xf32>
    %54 = arith.mulf %53, %53 : vector<8x16xf32>
    %cst_15 = arith.constant dense<0.000000e+00> : vector<8xf32>
    %55 = vector.multi_reduction <add>, %54, %cst_15 [1] : vector<8x16xf32> to vector<8xf32>
    %56 = vector.shape_cast %55 : vector<8xf32> to vector<8x1xf32>
    %cst_16 = arith.constant 1.600000e+01 : f32
    %57 = vector.broadcast %cst_16 : f32 to vector<8x1xf32>
    %58 = arith.divf %56, %57 : vector<8x1xf32>
    %59 = vector.broadcast %51 : vector<8x1xf32> to vector<8x16xf32>
    %60 = arith.subf %47, %59 : vector<8x16xf32>
    %cst_17 = arith.constant 9.99999974E-6 : f32
    %61 = vector.broadcast %cst_17 : f32 to vector<8x1xf32>
    %62 = arith.addf %58, %61 : vector<8x1xf32>
    %63 = math.rsqrt %62 : vector<8x1xf32>
    %64 = vector.broadcast %63 : vector<8x1xf32> to vector<8x16xf32>
    %65 = arith.mulf %60, %64 : vector<8x16xf32>
    %cst_18 = arith.constant dense<0.000000e+00> : vector<16x16xf32>
    %66 = tpu.matmul %65, %65, %cst_18 {dimension_numbers = #tpu.dot_dimension_numbers<[0], [0], [1], [1], [0, 1, 1, 1], [], []>} : vector<8x16xf32>, vector<8x16xf32>, vector<16x16xf32> -> vector<16x16xf32>
    %cst_19 = arith.constant 0.353553385 : f32
    %67 = vector.broadcast %cst_19 : f32 to vector<16x16xf32>
    %68 = arith.mulf %66, %67 : vector<16x16xf32>
    %69 = arith.maximumf %46, %68 : vector<16x16xf32>
    %70 = arith.subf %46, %69 : vector<16x16xf32>
    %71 = math.exp %70 : vector<16x16xf32>
    %72 = arith.subf %68, %69 : vector<16x16xf32>
    %73 = math.exp %72 : vector<16x16xf32>
    %74 = arith.addf %71, %73 : vector<16x16xf32>
    %cst_20 = arith.constant 1.000000e+00 : f32
    %75 = vector.broadcast %cst_20 : f32 to vector<16x16xf32>
    %76 = arith.divf %75, %74 : vector<16x16xf32>
    %77 = arith.mulf %71, %76 : vector<16x16xf32>
    %78 = arith.mulf %73, %76 : vector<16x16xf32>
    %79 = vector.shape_cast %77 : vector<16x16xf32> to vector<1x16x16xf32>
    %80 = vector.shape_cast %78 : vector<16x16xf32> to vector<1x16x16xf32>
    %81 = tpu.concatenate %79, %80 in 0 : vector<1x16x16xf32>, vector<1x16x16xf32> -> vector<2x16x16xf32>
    %c0_21 = arith.constant 0 : index
    %c0_22 = arith.constant 0 : index
    %c0_23 = arith.constant 0 : index
    %82 = vector.load %arg2[%c0_21, %c0_22, %c0_23] : memref<2x16x16xf32, #tpu.memory_space<vmem>>, vector<2x16x16xf32>
    tpu.vector_store %arg2[%c0_21, %c0_22, %c0_23], %81 {strides = array<i32>} : memref<2x16x16xf32, #tpu.memory_space<vmem>>, vector<2x16x16xf32>,
    return
  }
}

</mosaic_0001>

<llo_original>
// kernel: tpu_custom_call.1
$region0: #{tpu_custom_call.1}
  #allocation0 [shape = 'u32[]', space=smem, size = 0x4, offset = 0x4, fixed_abs, tag = 'smem constant byte address 0x4 - core index']
  #allocation1 [shape = 'u32[72,128]{1,0:T(1,128)}', space=vmem, size = 0x9000, scoped, tag = 'internal scratch']
  %s0 = inlined_call_operand.vmem [shape: f32[2,9,16], index: 0, kind: input, shape index: {}]
  %s1 = inlined_call_operand.vmem [shape: f32[8,45], index: 1, kind: input, shape index: {}]
  %s2 = inlined_call_operand.hbm [shape: f32[2,16,16], index: 2, kind: output, shape index: {}]
  %s3 = sld [smem:[#allocation0]]
  $region18: #{tpu_custom_call.1} parent=0
    _
  %s5 = ssub.s32 1, %s3
  %s6 = scalar_select 0, %s5, %s3
  $region1: #{tpu_custom_call.1} parent=0
    #allocation2 [shape = 'u8[16384]{0}', space=vmem, size = 0x4000, scoped, tag = 'output window, operand 0, single buffered']
    #allocation3 [shape = 's32[1]{0}', space=sflag, size = 0x4, scoped, tag = 'scoped memory for tpu_custom_call.1']
    %7 = vsyncpa [#allocation3], 0
    // Predicated region
    $region2: #{tpu_custom_call.1} parent=1 // pred_check
      _
    $region3: #{tpu_custom_call.1} parent=1 // pred_check_branch
      %9 = sbr.rel (0) target = $region5
    $region4: #{tpu_custom_call.1} parent=1 // pred_region
      _
    $region5: #{tpu_custom_call.1} parent=1 // pred_fallthru
      _
    // Predicated region
    $region6: #{tpu_custom_call.1} parent=1 // pred_check
      _
    $region7: #{tpu_custom_call.1} parent=1 // pred_check_branch
      %11 = sbr.rel (0) target = $region9
    $region8: #{tpu_custom_call.1} parent=1 // pred_region
      _
    $region9: #{tpu_custom_call.1} parent=1 // pred_fallthru
      _
    %v12 = vld [vmem:[%s1] sm:$0xff]
    %v13 = vld [vmem:[%s0] sm:$0xff]
    %v14 = vld [vmem:[%s0 + $0x8] sm:$0x1]
    %17 = vrot.lane.b32.xlu0 %v13, 114
    %v18 = vpop.permute.xlu0 %17
    %19 = vrot.lane.b32.xlu0 %v14, 114
    %v20 = vpop.permute.xlu0 %19
    %23 = vrot.lane.b32.xlu0 %v13, 2
    %v24 = vpop.permute.xlu0 %23
    %25 = vrot.lane.b32.xlu0 %v14, 2
    %v26 = vpop.permute.xlu0 %25
    %29 = vrot.lane.b32.xlu0 %v13, 18
    %v30 = vpop.permute.xlu0 %29
    %31 = vrot.lane.b32.xlu0 %v14, 18
    %v32 = vpop.permute.xlu0 %31
    %vm35 = vcmask 15360
    %v36 = vsel %vm35, %v18, %v24
    %v37 = vsel %vm35, %v20, %v26
    %vm38 = vcmask 146432
    %v39 = vsel %vm38, %v36, %v30
    %v40 = vsel %vm38, %v37, %v32
    %vm43 = vcmask 1040384
    %v44 = vrot.slane %v39, 7
    %v45 = vrot.slane %v40, 7
    %v46 = vsel %vm43, %v44, %v45
    %47 = vrot.lane.b32.xlu0 %v44, 127
    %v48 = vpop.permute.xlu0 %47
    %49 = vrot.lane.b32.xlu0 %v46, 127
    %v50 = vpop.permute.xlu0 %49
    %vm53 = vcmask 1041408
    %v54 = vrot.slane %v39, 6
    %v55 = vrot.slane %v40, 6
    %v56 = vsel %vm53, %v54, %v55
    %57 = vrot.lane.b32.xlu0 %v54, 126
    %v58 = vpop.permute.xlu0 %57
    %59 = vrot.lane.b32.xlu0 %v56, 126
    %v60 = vpop.permute.xlu0 %59
    %vm63 = vcmask 1042432
    %v64 = vrot.slane %v39, 5
    %v65 = vrot.slane %v40, 5
    %v66 = vsel %vm63, %v64, %v65
    %67 = vrot.lane.b32.xlu0 %v64, 125
    %v68 = vpop.permute.xlu0 %67
    %69 = vrot.lane.b32.xlu0 %v66, 125
    %v70 = vpop.permute.xlu0 %69
    %vm73 = vcmask 1043456
    %v74 = vrot.slane %v39, 4
    %v75 = vrot.slane %v40, 4
    %v76 = vsel %vm73, %v74, %v75
    %77 = vrot.lane.b32.xlu0 %v74, 124
    %v78 = vpop.permute.xlu0 %77
    %79 = vrot.lane.b32.xlu0 %v76, 124
    %v80 = vpop.permute.xlu0 %79
    %v83 = vsel %vm43, %v40, %v48
    %v84 = vsel %vm53, %v50, %v58
    %v85 = vsel %vm63, %v60, %v68
    %v86 = vsel %vm73, %v70, %v78
    %s87 = scalar_lea.vmem %s0, 16
    %v88 = vld [vmem:[%s87] sm:$0xff]
    %v89 = vld [vmem:[%s87 + $0x8] sm:$0x1]
    %92 = vrot.lane.b32.xlu0 %v88, 114
    %v93 = vpop.permute.xlu0 %92
    %94 = vrot.lane.b32.xlu0 %v89, 114
    %v95 = vpop.permute.xlu0 %94
    %98 = vrot.lane.b32.xlu0 %v88, 2
    %v99 = vpop.permute.xlu0 %98
    %100 = vrot.lane.b32.xlu0 %v89, 2
    %v101 = vpop.permute.xlu0 %100
    %104 = vrot.lane.b32.xlu0 %v88, 18
    %v105 = vpop.permute.xlu0 %104
    %106 = vrot.lane.b32.xlu0 %v89, 18
    %v107 = vpop.permute.xlu0 %106
    %v110 = vsel %vm35, %v93, %v99
    %v111 = vsel %vm35, %v95, %v101
    %v112 = vsel %vm38, %v110, %v105
    %v113 = vsel %vm38, %v111, %v107
    %v116 = vrot.slane %v112, 7
    %v117 = vrot.slane %v113, 7
    %v118 = vsel %vm43, %v116, %v117
    %119 = vrot.lane.b32.xlu0 %v116, 127
    %v120 = vpop.permute.xlu0 %119
    %121 = vrot.lane.b32.xlu0 %v118, 127
    %v122 = vpop.permute.xlu0 %121
    %v125 = vrot.slane %v112, 6
    %v126 = vrot.slane %v113, 6
    %v127 = vsel %vm53, %v125, %v126
    %128 = vrot.lane.b32.xlu0 %v125, 126
    %v129 = vpop.permute.xlu0 %128
    %130 = vrot.lane.b32.xlu0 %v127, 126
    %v131 = vpop.permute.xlu0 %130
    %v134 = vrot.slane %v112, 5
    %v135 = vrot.slane %v113, 5
    %v136 = vsel %vm63, %v134, %v135
    %137 = vrot.lane.b32.xlu0 %v134, 125
    %v138 = vpop.permute.xlu0 %137
    %139 = vrot.lane.b32.xlu0 %v136, 125
    %v140 = vpop.permute.xlu0 %139
    %v143 = vrot.slane %v112, 4
    %v144 = vrot.slane %v113, 4
    %v145 = vsel %vm73, %v143, %v144
    %146 = vrot.lane.b32.xlu0 %v143, 124
    %v147 = vpop.permute.xlu0 %146
    %148 = vrot.lane.b32.xlu0 %v145, 124
    %v149 = vpop.permute.xlu0 %148
    %v151 = vsel %vm43, %v113, %v120
    %v152 = vsel %vm53, %v122, %v129
    %v153 = vsel %vm63, %v131, %v138
    %v154 = vsel %vm73, %v140, %v147
    %159 = vrot.lane.b32.xlu0 %v112, 16
    %v160 = vpop.permute.xlu0 %159
    %161 = vrot.lane.b32.xlu0 %v151, 16
    %v162 = vpop.permute.xlu0 %161
    %163 = vrot.lane.b32.xlu0 %v152, 16
    %v164 = vpop.permute.xlu0 %163
    %165 = vrot.lane.b32.xlu0 %v153, 16
    %v166 = vpop.permute.xlu0 %165
    %167 = vrot.lane.b32.xlu0 %v154, 16
    %v168 = vpop.permute.xlu0 %167
    %169 = vrot.lane.b32.xlu0 %v149, 16
    %v170 = vpop.permute.xlu0 %169
    %vm177 = vcmask 130048
    %v178 = vsel %vm177, %v39, %v160
    %v179 = vsel %vm177, %v83, %v162
    %v180 = vsel %vm177, %v84, %v164
    %v181 = vsel %vm177, %v85, %v166
    %v182 = vsel %vm177, %v86, %v168
    %v183 = vsel %vm177, %v80, %v170
    %vm184 = vcmask 367616
    %v186 = vsel %vm184, %v12, 0
    %vm188 = vcmask 1044480
    %v190 = vsel %vm188, %v183, 0
    %192 = vmatpush.msra.mxu0 0.0
    %193 = vmatpush.msra.mxu0 0.0
    %194 = vmatpush.msra.mxu0 0.0
    %195 = vmatpush.msra.mxu0 0.0
    %196 = vmatpush.msra.mxu0 0.0
    %197 = vmatpush.msra.mxu0 0.0
    %198 = vmatpush.msra.mxu0 0.0
    %199 = vmatpush.msra.mxu0 0.0
    %200 = vmatpush.msra.mxu0 0.0
    %201 = vmatpush.msra.mxu0 0.0
    %202 = vmatpush.msra.mxu0 %v190
    %203 = vmatpush.msra.mxu0 %v182
    %204 = vmatpush.msra.mxu0 %v181
    %205 = vmatpush.msra.mxu0 %v180
    %206 = vmatpush.msra.mxu0 %v179
    %207 = vmatpush.msra.mxu0 %v178
    %208 = vmatmul.f32.gmra.mxu0 %v186
    %v209 = vpop.f32.mrf.mxu0
    %v210 = vadd.f32 0.0, %v209
    %211 = vdwg.mxu0
    %v212 = vsel %vm177, %v210, 0.0
    %213 = vadd.xlane.f32.xlu0 %v212
    %v214 = vpop.xlane.xlu0 %213
    %v215 = vrcp.pop 16.0
    %v216 = vmul.f32 16.0, %v215
    %v217 = vsub.f32 1.0, %v216
    %v218 = vmul.f32 %v215, %v217
    %v219 = vadd.f32 %v215, %v218
    %vm220 = vweird.f32 %v215
    %v221 = vsel %vm220, %v215, %v219
    %v222 = vmul.f32 %v214, %v221
    %v223 = vsub.f32 %v210, %v222
    %v224 = vmul.f32 %v223, %v223
    %v225 = vsel %vm177, %v224, 0.0
    %226 = vadd.xlane.f32.xlu0 %v225
    %v227 = vpop.xlane.xlu0 %226
    %v228 = vmul.f32 %v227, %v221
    %v229 = vadd.f32 %v228, 1e-05
    %v230 = vrsqrt.pop %v229
    %v231 = vmul.f32 %v230, %v229
    %v232 = vmul.f32 %v231, %v230
    %v233 = vmul.f32 0.5, %v232
    %v234 = vsub.f32 1.5, %v233
    %v235 = vmul.f32 %v230, %v234
    %vm236 = vweird.f32 %v229
    %vm237 = vweird.f32 %v230
    %vm238 = vmor %vm236, %vm237
    %v239 = vsel %vm238, %v230, %v235
    %v240 = vmul.f32 %v223, %v239
    %241 = vxpose.xlu0.b32.start [1/16] %v240, 128
    %242 = vxpose.xlu0.b32.cont [2/16] 0.0, 128
    %243 = vxpose.xlu0.b32.cont [3/16] 0.0, 128
    %244 = vxpose.xlu0.b32.cont [4/16] 0.0, 128
    %245 = vxpose.xlu0.b32.cont [5/16] 0.0, 128
    %246 = vxpose.xlu0.b32.cont [6/16] 0.0, 128
    %247 = vxpose.xlu0.b32.cont [7/16] 0.0, 128
    %248 = vxpose.xlu0.b32.cont [8/16] 0.0, 128
    %249 = vxpose.xlu0.b32.cont [9/16] 0.0, 128
    %250 = vxpose.xlu0.b32.cont [10/16] 0.0, 128
    %251 = vxpose.xlu0.b32.cont [11/16] 0.0, 128
    %252 = vxpose.xlu0.b32.cont [12/16] 0.0, 128
    %253 = vxpose.xlu0.b32.cont [13/16] 0.0, 128
    %254 = vxpose.xlu0.b32.cont [14/16] 0.0, 128
    %255 = vxpose.xlu0.b32.cont [15/16] 0.0, 128
    %256 = vxpose.xlu0.b32.end [16/16] 0.0, 128
    %v257 = vpop.trf.xlu0
    %v258 = vpop.trf.xlu0
    %v259 = vpop.trf.xlu0
    %v260 = vpop.trf.xlu0
    %v261 = vpop.trf.xlu0
    %v262 = vpop.trf.xlu0
    %v263 = vpop.trf.xlu0
    %v264 = vpop.trf.xlu0
    %v265 = vpop.trf.xlu0
    %v266 = vpop.trf.xlu0
    %v267 = vpop.trf.xlu0
    %v268 = vpop.trf.xlu0
    %v269 = vpop.trf.xlu0
    %v270 = vpop.trf.xlu0
    %v271 = vpop.trf.xlu0
    %v272 = vpop.trf.xlu0
    %vm273 = vcmask 64512
    %v275 = vsel %vm273, %v257, 0
    %v278 = vsel %vm273, %v258, 0
    %280 = vmatpush.msra.mxu0 0.0
    %281 = vmatpush.msra.mxu0 0.0
    %282 = vmatpush.msra.mxu0 0.0
    %283 = vmatpush.msra.mxu0 0.0
    %284 = vmatpush.msra.mxu0 0.0
    %285 = vmatpush.msra.mxu0 0.0
    %286 = vmatpush.msra.mxu0 0.0
    %287 = vmatpush.msra.mxu0 0.0
    %288 = vmatpush.msra.mxu0 0.0
    %289 = vmatpush.msra.mxu0 0.0
    %290 = vmatpush.msra.mxu0 0.0
    %291 = vmatpush.msra.mxu0 0.0
    %292 = vmatpush.msra.mxu0 0.0
    %293 = vmatpush.msra.mxu0 0.0
    %294 = vmatpush.msra.mxu0 0.0
    %295 = vmatpush.msra.mxu0 %v240
    %296 = vmatmul.f32.gmra.mxu0 %v275
    %v297 = vpop.f32.mrf.mxu0
    %v298 = vadd.f32 0.0, %v297
    %299 = vmatmul.f32.gmra.mxu0 %v278
    %v300 = vpop.f32.mrf.mxu0
    %v301 = vadd.f32 0.0, %v300
    %302 = vdwg.mxu0
    %v303 = vmul.f32 %v298, 0.35355338
    %v304 = vmul.f32 %v301, 0.35355338
    %306 = vrot.lane.b32.xlu0 %v210, 112
    %v307 = vpop.permute.xlu0 %306
    %v309 = vsel %vm177, %v307, 0.0
    %310 = vadd.xlane.f32.xlu0 %v309
    %v311 = vpop.xlane.xlu0 %310
    %v312 = vmul.f32 %v311, %v221
    %v313 = vsub.f32 %v210, %v312
    %v314 = vmul.f32 %v313, %v313
    %316 = vrot.lane.b32.xlu0 %v314, 112
    %v317 = vpop.permute.xlu0 %316
    %v319 = vsel %vm177, %v317, 0.0
    %320 = vadd.xlane.f32.xlu0 %v319
    %v321 = vpop.xlane.xlu0 %320
    %v322 = vmul.f32 %v321, %v221
    %v323 = vadd.f32 %v322, 1e-05
    %v324 = vrsqrt.pop %v323
    %v325 = vmul.f32 %v324, %v323
    %v326 = vmul.f32 %v325, %v324
    %v327 = vmul.f32 0.5, %v326
    %v328 = vsub.f32 1.5, %v327
    %v329 = vmul.f32 %v324, %v328
    %vm330 = vweird.f32 %v323
    %vm331 = vweird.f32 %v324
    %vm332 = vmor %vm330, %vm331
    %v333 = vsel %vm332, %v324, %v329
    %v334 = vmul.f32 %v313, %v333
    %336 = vrot.lane.b32.xlu0 %v334, 112
    %v337 = vpop.permute.xlu0 %336
    %339 = vxpose.xlu0.b32.start [1/16] %v337, 128
    %340 = vxpose.xlu0.b32.cont [2/16] 0.0, 128
    %341 = vxpose.xlu0.b32.cont [3/16] 0.0, 128
    %342 = vxpose.xlu0.b32.cont [4/16] 0.0, 128
    %343 = vxpose.xlu0.b32.cont [5/16] 0.0, 128
    %344 = vxpose.xlu0.b32.cont [6/16] 0.0, 128
    %345 = vxpose.xlu0.b32.cont [7/16] 0.0, 128
    %346 = vxpose.xlu0.b32.cont [8/16] 0.0, 128
    %347 = vxpose.xlu0.b32.cont [9/16] 0.0, 128
    %348 = vxpose.xlu0.b32.cont [10/16] 0.0, 128
    %349 = vxpose.xlu0.b32.cont [11/16] 0.0, 128
    %350 = vxpose.xlu0.b32.cont [12/16] 0.0, 128
    %351 = vxpose.xlu0.b32.cont [13/16] 0.0, 128
    %352 = vxpose.xlu0.b32.cont [14/16] 0.0, 128
    %353 = vxpose.xlu0.b32.cont [15/16] 0.0, 128
    %354 = vxpose.xlu0.b32.end [16/16] 0.0, 128
    %v355 = vpop.trf.xlu0
    %v356 = vpop.trf.xlu0
    %v357 = vpop.trf.xlu0
    %v358 = vpop.trf.xlu0
    %v359 = vpop.trf.xlu0
    %v360 = vpop.trf.xlu0
    %v361 = vpop.trf.xlu0
    %v362 = vpop.trf.xlu0
    %v363 = vpop.trf.xlu0
    %v364 = vpop.trf.xlu0
    %v365 = vpop.trf.xlu0
    %v366 = vpop.trf.xlu0
    %v367 = vpop.trf.xlu0
    %v368 = vpop.trf.xlu0
    %v369 = vpop.trf.xlu0
    %v370 = vpop.trf.xlu0
    %v372 = vsel %vm273, %v355, 0
    %v375 = vsel %vm273, %v356, 0
    %377 = vmatpush.msra.mxu0 0.0
    %378 = vmatpush.msra.mxu0 0.0
    %379 = vmatpush.msra.mxu0 0.0
    %380 = vmatpush.msra.mxu0 0.0
    %381 = vmatpush.msra.mxu0 0.0
    %382 = vmatpush.msra.mxu0 0.0
    %383 = vmatpush.msra.mxu0 0.0
    %384 = vmatpush.msra.mxu0 0.0
    %385 = vmatpush.msra.mxu0 0.0
    %386 = vmatpush.msra.mxu0 0.0
    %387 = vmatpush.msra.mxu0 0.0
    %388 = vmatpush.msra.mxu0 0.0
    %389 = vmatpush.msra.mxu0 0.0
    %390 = vmatpush.msra.mxu0 0.0
    %391 = vmatpush.msra.mxu0 0.0
    %392 = vmatpush.msra.mxu0 %v337
    %393 = vmatmul.f32.gmra.mxu0 %v372
    %v394 = vpop.f32.mrf.mxu0
    %v395 = vadd.f32 0.0, %v394
    %396 = vmatmul.f32.gmra.mxu0 %v375
    %v397 = vpop.f32.mrf.mxu0
    %v398 = vadd.f32 0.0, %v397
    %399 = vdwg.mxu0
    %v400 = vmul.f32 %v395, 0.35355338
    %v401 = vmul.f32 %v398, 0.35355338
    %v402 = vmax.f32 %v303, %v400
    %v403 = vmax.f32 %v304, %v401
    %v404 = vsub.f32 %v303, %v402
    %v405 = vsub.f32 %v304, %v403
    %v406 = vmul.f32 %v404, 1.442695
    %v407 = vpow.pop %v406
    %v408 = vmul.f32 %v405, 1.442695
    %v409 = vpow.pop %v408
    %v410 = vsub.f32 %v400, %v402
    %v411 = vsub.f32 %v401, %v403
    %v412 = vmul.f32 %v410, 1.442695
    %v413 = vpow.pop %v412
    %v414 = vmul.f32 %v411, 1.442695
    %v415 = vpow.pop %v414
    %v416 = vadd.f32 %v407, %v413
    %v417 = vadd.f32 %v409, %v415
    %v418 = vrcp.pop %v416
    %v419 = vmul.f32 %v416, %v418
    %v420 = vsub.f32 1.0, %v419
    %v421 = vmul.f32 %v418, %v420
    %v422 = vadd.f32 %v418, %v421
    %vm423 = vweird.f32 %v416
    %vm424 = vweird.f32 %v418
    %vm425 = vmor %vm423, %vm424
    %v426 = vsel %vm425, %v418, %v422
    %v427 = vand.u32 2147483647, %v416
    %vm428 = vcmp.eq.f32.partialorder %v427, 8.507059e+37
    %v429 = vand.u32 %v416, 2147483648
    %v430 = vor.u32 1.1754944e-38, %v429
    %v431 = vsel %vm428, %v430, %v426
    %v432 = vmul.f32 1.0, %v431
    %v433 = vrcp.pop %v417
    %v434 = vmul.f32 %v417, %v433
    %v435 = vsub.f32 1.0, %v434
    %v436 = vmul.f32 %v433, %v435
    %v437 = vadd.f32 %v433, %v436
    %vm438 = vweird.f32 %v417
    %vm439 = vweird.f32 %v433
    %vm440 = vmor %vm438, %vm439
    %v441 = vsel %vm440, %v433, %v437
    %v442 = vand.u32 2147483647, %v417
    %vm443 = vcmp.eq.f32.partialorder %v442, 8.507059e+37
    %v444 = vand.u32 %v417, 2147483648
    %v445 = vor.u32 1.1754944e-38, %v444
    %v446 = vsel %vm443, %v445, %v441
    %v447 = vmul.f32 1.0, %v446
    %v448 = vmul.f32 %v407, %v432
    %v449 = vmul.f32 %v409, %v447
    %v450 = vmul.f32 %v413, %v432
    %v451 = vmul.f32 %v415, %v447
    %452 = vst.msk [vmem:[#allocation2] sm:$0xff] %vm177, %v448
    %453 = vst.msk [vmem:[#allocation2 + $0x8] sm:$0xff] %vm177, %v449
    %454 = vst.msk [vmem:[#allocation2 + $0x10] sm:$0xff] %vm177, %v450
    %455 = vst.msk [vmem:[#allocation2 + $0x18] sm:$0xff] %vm177, %v451
    // Predicated region
    $region10: #{tpu_custom_call.1} parent=1 // pred_check
      _
    $region11: #{tpu_custom_call.1} parent=1 // pred_check_branch
      %457 = sbr.rel (0) target = $region13
    $region12: #{tpu_custom_call.1} parent=1 // pred_region
      %459 = vsyncadd [#allocation3], 0
      %s460 = sshll.u32 [#allocation2], 4
      %s461 = int_to_ptr.vmem [resolvable:$true] %s460
      %s462 = sshll.u32 %s2, 4
      %s463 = int_to_ptr.hbm [resolvable:$true] %s462
      %468 = dma.vmem_to_hbm [thread:$0]  %s461, 512, %s463, [#allocation3], 128, 128, 8
    $region13: #{tpu_custom_call.1} parent=1 // pred_fallthru
      _
    // Predicated region
    $region14: #{tpu_custom_call.1} parent=1 // pred_check
      _
    $region15: #{tpu_custom_call.1} parent=1 // pred_check_branch
      %470 = sbr.rel (0) target = $region17
    $region16: #{tpu_custom_call.1} parent=1 // pred_region
      %472 = dma.done [#allocation3], 512
    $region17: #{tpu_custom_call.1} parent=1 // pred_fallthru
      _
    %473 = vsyncpa [#allocation3], 1

</llo_original>
